<compile_context>
chip_gen: v6e
topology: v6e:2x2x1
jax: 0.10.0
libtpu: 0.0.40
codegen_flags: <defaults>
</compile_context>

<pallas_src>
import jax
import jax.numpy as jnp
from jax.experimental import pallas as pl
from jax.experimental.pallas import tpu as pltpu

_LANE = 1024              # lane-dense last dim (multiple of 128)
_MAX_TILE_ROWS = 512      # (512, 1024) f32 = 2 MiB per block
_PALLAS_MIN_ELEMS = 1024  # below this, kernel launch/DMA overhead dominates -> plain XLA


def _affine_kernel(wb_ref, x_ref, o_ref):
    # wb_ref: (2,) f32 in SMEM -> [weight, bias] (read once per step as scalars).
    # x_ref / o_ref: (tile_rows, _LANE) f32 tiles in VMEM.
    o_ref[...] = x_ref[...] * wb_ref[0] + wb_ref[1]


def linear_regression_v2(x: jax.Array, weight: jax.Array, bias: jax.Array) -> jax.Array:
    """Forward pass of nn.Linear(1, 1): y = x @ W.T + b  ==  w * x + b.

    Args:
      x:      (..., 1) float32 (PyTorch feeds (N, 1))
      weight: (1, 1)   float32 (PyTorch stores Linear weight as (out, in))
      bias:   (1,)     float32
    Returns:
      same shape as x.
    """
    w = weight.reshape(())
    b = bias.reshape(())
    total = x.size  # number of scalar elements (last dim is the single feature)

    if total < _PALLAS_MIN_ELEMS:
        # Tiny batch: let XLA fuse the affine; Pallas launch would be pure overhead.
        return x * w + b

    # --- lane-dense slab (wrapper-side layout plumbing, no compute) -------------
    flat = x.reshape(-1)
    rows = pl.cdiv(total, _LANE)
    padded = rows * _LANE
    if padded != total:
        flat = jnp.pad(flat, (0, padded - total))
    x2d = flat.reshape(rows, _LANE)

    # Block shape: either a (8,128)-divisible (512, 1024) tile, or the full array
    # when rows < 512 (full-dim blocks are always legal). Grid handles a partial
    # last block via cdiv (OOB writes are masked, elementwise compute is safe).
    tile_rows = _MAX_TILE_ROWS if rows >= _MAX_TILE_ROWS else rows
    grid = (pl.cdiv(rows, tile_rows),)

    wb = jnp.stack([w, b]).astype(x.dtype)  # (2,) scalars -> SMEM

    y2d = pl.pallas_call(
        _affine_kernel,
        out_shape=jax.ShapeDtypeStruct((rows, _LANE), x.dtype),
        grid=grid,
        in_specs=[
            pl.BlockSpec(memory_space=pltpu.MemorySpace.SMEM),        # [w, b] scalars
            pl.BlockSpec((tile_rows, _LANE), lambda i: (i, 0)),       # x tile
        ],
        out_specs=pl.BlockSpec((tile_rows, _LANE), lambda i: (i, 0)),
        compiler_params=pltpu.CompilerParams(
            # Rows are independent -> parallel; sharded across both TensorCores on v7x.
            dimension_semantics=("parallel",),
        ),
    )(wb, x2d)

    return y2d.reshape(-1)[:total].reshape(x.shape)


if __name__ == "__main__":
    key = jax.random.PRNGKey(0)
    kx, kw, kb, kx2 = jax.random.split(key, 4)

    # Parameters of nn.Linear(1, 1): weight (out, in) = (1, 1), bias (1,),
    # mimicking PyTorch's uniform(-1/sqrt(in_features), +1/sqrt(in_features)) init.
    weight = jax.random.uniform(kw, (1, 1), minval=-1.0, maxval=1.0, dtype=jnp.float32)
    bias = jax.random.uniform(kb, (1,), minval=-1.0, maxval=1.0, dtype=jnp.float32)

    # Pallas path: N = 8192 scalars -> lane-dense (8, 1024) slab, single-tile grid.
    N = 8192
    x = jax.random.normal(kx, (N, 1), dtype=jnp.float32)
    y = linear_regression_v2(x, weight, bias)
    jax.block_until_ready(y)

    y_ref = x @ weight.T + bias
    assert y.shape == (N, 1), y.shape
    assert jnp.allclose(y, y_ref, atol=1e-6, rtol=1e-6)

    # Tiny-batch path (size gate -> plain XLA fusion), matching the original N=8 use case.
    x_small = jax.random.normal(kx2, (8, 1), dtype=jnp.float32)
    y_small = linear_regression_v2(x_small, weight, bias)
    jax.block_until_ready(y_small)
    assert y_small.shape == (8, 1)
    assert jnp.allclose(y_small, x_small @ weight.T + bias, atol=1e-6, rtol=1e-6)

    print("KERNEL_OK")
</pallas_src>

<mosaic_0001>
module attributes {stable_mosaic.version = 11 : i64} {
  func.func @_affine_kernel(%arg0: i32, %arg1: memref<2xf32, #tpu.memory_space<smem>>, %arg2: memref<8x1024xf32, #tpu.memory_space<vmem>>, %arg3: memref<8x1024xf32, #tpu.memory_space<vmem>>) attributes {dimension_semantics = [#tpu.dimension_semantics<parallel>], iteration_bounds = array<i64: 1>, scalar_prefetch = 0 : i64, scratch_operands = 0 : i64, tpu.core_type = #tpu.core_type<tc>, window_params = [{transform_indices = @transform_0, window_bounds = array<i64: 2>}, {transform_indices = @transform_1, window_bounds = array<i64: 8, 1024>}, {transform_indices = @transform_2, window_bounds = array<i64: 8, 1024>}]} {
    %c0 = arith.constant 0 : index
    %c0_0 = arith.constant 0 : index
    %0 = vector.load %arg2[%c0, %c0_0] : memref<8x1024xf32, #tpu.memory_space<vmem>>, vector<8x1024xf32>
    %c0_1 = arith.constant 0 : index
    %1 = memref.load %arg1[%c0_1] : memref<2xf32, #tpu.memory_space<smem>>
    %2 = vector.broadcast %1 : f32 to vector<8x1024xf32>
    %3 = arith.mulf %0, %2 : vector<8x1024xf32>
    %c1 = arith.constant 1 : index
    %4 = memref.load %arg1[%c1] : memref<2xf32, #tpu.memory_space<smem>>
    %5 = vector.broadcast %4 : f32 to vector<8x1024xf32>
    %6 = arith.addf %3, %5 : vector<8x1024xf32>
    %c0_2 = arith.constant 0 : index
    %c0_3 = arith.constant 0 : index
    %7 = vector.load %arg3[%c0_2, %c0_3] : memref<8x1024xf32, #tpu.memory_space<vmem>>, vector<8x1024xf32>
    tpu.vector_store %arg3[%c0_2, %c0_3], %6 {strides = array<i32>} : memref<8x1024xf32, #tpu.memory_space<vmem>>, vector<8x1024xf32>,
    return
  }
  func.func @transform_0(%arg0: i32) -> i32 {
    %c0_i32 = arith.constant 0 : i32
    %c0_i32_0 = arith.constant 0 : i32
    return %c0_i32 : i32
  }
  func.func @transform_1(%arg0: i32) -> (i32, i32) {
    %c0_i32 = arith.constant 0 : i32
    %c0_i32_0 = arith.constant 0 : i32
    return %arg0, %c0_i32 : i32, i32
  }
  func.func @transform_2(%arg0: i32) -> (i32, i32) {
    %c0_i32 = arith.constant 0 : i32
    %c0_i32_0 = arith.constant 0 : i32
    return %arg0, %c0_i32 : i32, i32
  }
}

</mosaic_0001>

<llo_original>
// kernel: tpu_custom_call.1
$region0: #{tpu_custom_call.1}
  #allocation0 [shape = 'u32[]', space=smem, size = 0x4, offset = 0x4, fixed_abs, tag = 'smem constant byte address 0x4 - core index']
  #allocation1 [shape = 'u32[144,128]{1,0:T(1,128)}', space=vmem, size = 0x12000, scoped, tag = 'internal scratch']
  %s0 = inlined_call_operand.hbm [shape: f32[2], index: 0, kind: input, shape index: {}]
  %s1 = inlined_call_operand.hbm [shape: f32[8,1024], index: 1, kind: input, shape index: {}]
  %s2 = inlined_call_operand.hbm [shape: f32[8,1024], index: 2, kind: output, shape index: {}]
  %s3 = sld [smem:[#allocation0]]
  $region26: #{tpu_custom_call.1} parent=0
    _
  %s5 = ssub.s32 1, %s3
  %s6 = scalar_select 0, %s5, %s3
  $region1: #{tpu_custom_call.1} parent=0
    #allocation2 [shape = 'u8[512]{0}', space=smem, size = 0x200, scoped, tag = 'input window, operand 0, single buffered']
    #allocation3 [shape = 's32[1]{0}', space=sflag, size = 0x4, scoped, tag = 'scoped memory for tpu_custom_call.1']
    #allocation4 [shape = 's32[1]{0}', space=sflag, size = 0x4, scoped, tag = 'scoped memory for tpu_custom_call.1']
    #allocation5 [shape = 's32[1]{0}', space=sflag, size = 0x4, scoped, tag = 'scoped memory for tpu_custom_call.1']
    #allocation6 [shape = 'u8[32768]{0}', space=vmem, size = 0x8000, scoped, tag = 'input window, operand 1, single buffered']
    #allocation7 [shape = 'u8[32768]{0}', space=vmem, size = 0x8000, scoped, tag = 'output window, operand 0, single buffered']
    %7 = vsyncpa [#allocation5], 0
    %8 = vsyncpa [#allocation3], 0
    %9 = vsyncpa [#allocation4], 0
    // Predicated region
    $region2: #{tpu_custom_call.1} parent=1 // pred_check
      _
    $region3: #{tpu_custom_call.1} parent=1 // pred_check_branch
      %11 = sbr.rel (0) target = $region5
    $region4: #{tpu_custom_call.1} parent=1 // pred_region
      %s13 = ssub.s32 16, 16
      %14 = vsyncadd [#allocation5], %s13
      %17 = dma.hbm_to_smem %s0, 16, [#allocation2], [#allocation5]
    $region5: #{tpu_custom_call.1} parent=1 // pred_fallthru
      _
    // Predicated region
    $region6: #{tpu_custom_call.1} parent=1 // pred_check
      _
    $region7: #{tpu_custom_call.1} parent=1 // pred_check_branch
      %19 = sbr.rel (0) target = $region9
    $region8: #{tpu_custom_call.1} parent=1 // pred_region
      %s21 = ssub.s32 1024, 1024
      %22 = vsyncadd [#allocation3], %s21
      %s24 = sshll.u32 [#allocation6], 4
      %s25 = int_to_ptr.vmem [resolvable:$true] %s24
      %27 = dma.hbm_to_vmem [thread:$0]  %s1, 1024, %s25, [#allocation3]
    $region9: #{tpu_custom_call.1} parent=1 // pred_fallthru
      _
    // Predicated region
    $region10: #{tpu_custom_call.1} parent=1 // pred_check
      _
    $region11: #{tpu_custom_call.1} parent=1 // pred_check_branch
      %29 = sbr.rel (0) target = $region13
    $region12: #{tpu_custom_call.1} parent=1 // pred_region
      %30 = dma.done [#allocation5], 16
    $region13: #{tpu_custom_call.1} parent=1 // pred_fallthru
      _
    // Predicated region
    $region14: #{tpu_custom_call.1} parent=1 // pred_check
      _
    $region15: #{tpu_custom_call.1} parent=1 // pred_check_branch
      %32 = sbr.rel (0) target = $region17
    $region16: #{tpu_custom_call.1} parent=1 // pred_region
      %33 = dma.done [#allocation3], 1024
    $region17: #{tpu_custom_call.1} parent=1 // pred_fallthru
      _
    %34 = sfence
    %v35 = vld [vmem:[#allocation6] sm:$0xff]
    %v36 = vld [vmem:[#allocation6 + $0x8] sm:$0xff]
    %v37 = vld [vmem:[#allocation6 + $0x10] sm:$0xff]
    %v38 = vld [vmem:[#allocation6 + $0x18] sm:$0xff]
    %v39 = vld [vmem:[#allocation6 + $0x20] sm:$0xff]
    %v40 = vld [vmem:[#allocation6 + $0x28] sm:$0xff]
    %v41 = vld [vmem:[#allocation6 + $0x30] sm:$0xff]
    %v42 = vld [vmem:[#allocation6 + $0x38] sm:$0xff]
    %s43 = sld [smem:[#allocation2]]
    %v44 = vstv %s43
    %v45 = vmul.f32 %v35, %v44
    %v46 = vmul.f32 %v36, %v44
    %v47 = vmul.f32 %v37, %v44
    %v48 = vmul.f32 %v38, %v44
    %v49 = vmul.f32 %v39, %v44
    %v50 = vmul.f32 %v40, %v44
    %v51 = vmul.f32 %v41, %v44
    %v52 = vmul.f32 %v42, %v44
    %s53 = sld [smem:[#allocation2 + $0x1]]
    %v54 = vstv %s53
    %v55 = vadd.f32 %v45, %v54
    %v56 = vadd.f32 %v46, %v54
    %v57 = vadd.f32 %v47, %v54
    %v58 = vadd.f32 %v48, %v54
    %v59 = vadd.f32 %v49, %v54
    %v60 = vadd.f32 %v50, %v54
    %v61 = vadd.f32 %v51, %v54
    %v62 = vadd.f32 %v52, %v54
    %63 = vst [vmem:[#allocation7] sm:$0xff] %v55
    %64 = vst [vmem:[#allocation7 + $0x8] sm:$0xff] %v56
    %65 = vst [vmem:[#allocation7 + $0x10] sm:$0xff] %v57
    %66 = vst [vmem:[#allocation7 + $0x18] sm:$0xff] %v58
    %67 = vst [vmem:[#allocation7 + $0x20] sm:$0xff] %v59
    %68 = vst [vmem:[#allocation7 + $0x28] sm:$0xff] %v60
    %69 = vst [vmem:[#allocation7 + $0x30] sm:$0xff] %v61
    %70 = vst [vmem:[#allocation7 + $0x38] sm:$0xff] %v62
    // Predicated region
    $region18: #{tpu_custom_call.1} parent=1 // pred_check
      _
    $region19: #{tpu_custom_call.1} parent=1 // pred_check_branch
      %72 = sbr.rel (0) target = $region21
    $region20: #{tpu_custom_call.1} parent=1 // pred_region
      %s74 = ssub.s32 1024, 1024
      %75 = vsyncadd [#allocation4], %s74
      %s77 = sshll.u32 [#allocation7], 4
      %s78 = int_to_ptr.vmem [resolvable:$true] %s77
      %80 = dma.vmem_to_hbm [thread:$0]  %s78, 1024, %s2, [#allocation4]
    $region21: #{tpu_custom_call.1} parent=1 // pred_fallthru
      _
    // Predicated region
    $region22: #{tpu_custom_call.1} parent=1 // pred_check
      _
    $region23: #{tpu_custom_call.1} parent=1 // pred_check_branch
      %82 = sbr.rel (0) target = $region25
    $region24: #{tpu_custom_call.1} parent=1 // pred_region
      %83 = dma.done [#allocation4], 1024
    $region25: #{tpu_custom_call.1} parent=1 // pred_fallthru
      _
    %84 = vsyncpa [#allocation3], 1
    %85 = vsyncpa [#allocation4], 1
    %86 = vsyncpa [#allocation5], 1

</llo_original>
